<compile_context>
chip_gen: v5e
topology: v5e:2x2
jax: 0.10.0
libtpu: 0.0.40
codegen_flags: <defaults>
</compile_context>

<pallas_src>
import functools

import numpy as np
import jax
import jax.numpy as jnp
from jax import lax
from jax.experimental import pallas as pl
from jax.experimental.pallas import tpu as pltpu


def _round_up(x, m):
    return ((x + m - 1) // m) * m


def _embedding_kernel(idx_ref, table_ref, out_ref, *, num_fields):
    """idx_ref:   (TILE_B, F) int32 — offsets + per-field f*V shift already folded.
    table_ref: (K_pad, N_pad) block-diagonal VMEM-resident table.
    out_ref:   (TILE_B, N_pad) lane-dense output slab."""
    tile_b = idx_ref.shape[0]
    k_pad = table_ref.shape[0]
    idx = idx_ref[...]                                             # (TILE_B, F)
    # Hoisted iota, reused for every field (JAX does not CSE broadcasts).
    iota = lax.broadcasted_iota(jnp.int32, (tile_b, k_pad), 1)     # (TILE_B, K_pad)
    # Combined one-hot: field f's matches land in lanes [f*V, (f+1)*V);
    # blocks are disjoint, so the sum stays exactly {0, 1}.
    onehot = jnp.zeros((tile_b, k_pad), jnp.float32)
    for f in range(num_fields):                                    # small static unroll
        onehot = onehot + (iota == idx[:, f:f + 1]).astype(jnp.float32)
    # Single K/N=128-aligned MXU matmul == exact F-way row gather.
    # HIGHEST keeps f32 table rows bit-exact (HIGH/bf16_3x would not).
    rows = jnp.dot(onehot, table_ref[...],
                   preferred_element_type=jnp.float32,
                   precision=lax.Precision.HIGHEST)                # (TILE_B, N_pad)
    out_ref[...] = rows.astype(out_ref.dtype)                      # one full-lane store


def features_embedding(x, offsets, table, *, tile_b=None):
    """x: (B, F) int, offsets: (F,) int, table: (V, D) f32 -> (B, F, D) f32."""
    B, F = x.shape
    V, D = table.shape

    # Tile selection: >=512 rows/step to amortize grid overhead, cap at 2048,
    # keep ~>=8 grid steps for v7x megacore, clamp for tiny batches.
    if tile_b is None:
        tile_b = min(2048,
                     max(512, _round_up(max(B // 8, 1), 8)),
                     _round_up(B, 8))
    tile_b = max(8, _round_up(tile_b, 8))
    Bp = _round_up(B, tile_b)

    # Block-diagonal table: field f's rows at [f*V, f*V+V), cols [f*D, f*D+D).
    # K/N padded to multiples of 128 (native MXU tile, full-lane output store).
    K, N = F * V, F * D
    K_pad, N_pad = _round_up(K, 128), _round_up(N, 128)
    bd_table = jnp.zeros((K_pad, N_pad), table.dtype)
    for f in range(F):
        bd_table = bd_table.at[f * V:(f + 1) * V, f * D:(f + 1) * D].set(table)

    # Fold per-field embedding offsets AND the block-diagonal field shift (f*V)
    # in the wrapper — one cheap XLA add.
    field_shift = (jnp.arange(F, dtype=jnp.int32) * V)[None, :]
    idx = x.astype(jnp.int32) + offsets.astype(jnp.int32)[None, :] + field_shift

    if Bp != B:
        idx = jnp.pad(idx, ((0, Bp - B), (0, 0)))   # padded rows harmless, sliced off

    kernel = functools.partial(_embedding_kernel, num_fields=F)

    # VMEM budget: resident table + double-buffered idx/out tiles + headroom
    # for the in-kernel iota / one-hot intermediates.
    itemsize = table.dtype.itemsize
    table_bytes = K_pad * N_pad * itemsize
    io_bytes = 2 * (tile_b * F * 4 + tile_b * N_pad * itemsize)
    scratch_bytes = 4 * tile_b * K_pad * 4
    vmem_limit = min(48 * 1024 * 1024,
                     max(32 * 1024 * 1024,
                         int(1.5 * (table_bytes + io_bytes + scratch_bytes))))

    out = pl.pallas_call(
        kernel,
        out_shape=jax.ShapeDtypeStruct((Bp, N_pad), table.dtype),
        grid=(Bp // tile_b,),
        in_specs=[
            pl.BlockSpec((tile_b, F), lambda i: (i, 0)),       # per-tile shifted indices
            pl.BlockSpec((K_pad, N_pad), lambda i: (0, 0)),    # resident block-diag table
        ],
        out_specs=pl.BlockSpec((tile_b, N_pad), lambda i: (i, 0)),  # lane-dense slab
        compiler_params=pltpu.CompilerParams(
            dimension_semantics=("parallel",),
            vmem_limit_bytes=vmem_limit),
    )(idx, bd_table)

    return out[:B, :N].reshape(B, F, D)


def make_params(field_dims, embed_dim, key):
    """Deterministic parameter init matching the PyTorch module shapes."""
    vocab = int(np.sum(field_dims))
    # xavier_uniform_ on a (vocab, embed_dim) weight
    a = float(np.sqrt(6.0 / (vocab + embed_dim)))
    table = jax.random.uniform(key, (vocab, embed_dim),
                               dtype=jnp.float32, minval=-a, maxval=a)
    offsets = jnp.asarray(
        np.array((0, *np.cumsum(field_dims)[:-1]), dtype=np.int32))
    return table, offsets


if __name__ == "__main__":
    field_dims = (10, 8, 6, 4)   # 4 categorical fields -> V = 28
    embed_dim = 32
    B = 2
    F = len(field_dims)

    key = jax.random.PRNGKey(0)
    k_table, k_idx = jax.random.split(key)

    table, offsets = make_params(field_dims, embed_dim, k_table)

    # per-field indices: x[:, f] in [0, field_dims[f])
    maxvals = jnp.asarray(np.array(field_dims, dtype=np.int32))[None, :]
    x = (jax.random.randint(k_idx, (B, F), 0, 2**30, dtype=jnp.int32) % maxvals)

    out = features_embedding(x, offsets, table)
    out = jax.block_until_ready(out)

    # reference (plain JAX) check
    ref = jnp.take(table, x + offsets[None, :], axis=0)
    assert out.shape == (B, F, embed_dim)
    np.testing.assert_allclose(np.asarray(out), np.asarray(ref),
                               rtol=1e-6, atol=1e-6)

    print("KERNEL_OK")
</pallas_src>

<mosaic_0001>
module attributes {stable_mosaic.version = 11 : i64} {
  func.func @_embedding_kernel(%arg0: i32, %arg1: memref<8x4xi32, #tpu.memory_space<vmem>>, %arg2: memref<128x128xf32, #tpu.memory_space<vmem>>, %arg3: memref<8x128xf32, #tpu.memory_space<vmem>>) attributes {dimension_semantics = [#tpu.dimension_semantics<parallel>], iteration_bounds = array<i64: 1>, scalar_prefetch = 0 : i64, scratch_operands = 0 : i64, tpu.core_type = #tpu.core_type<tc>, window_params = [{transform_indices = @transform_0, window_bounds = array<i64: 8, 4>}, {pipeline_mode = #tpu.pipeline_mode<synchronous>, transform_indices = @transform_1, window_bounds = array<i64: 128, 128>}, {transform_indices = @transform_2, window_bounds = array<i64: 8, 128>}]} {
    %c0 = arith.constant 0 : index
    %c0_0 = arith.constant 0 : index
    %0 = vector.load %arg1[%c0, %c0_0] : memref<8x4xi32, #tpu.memory_space<vmem>>, vector<8x4xi32>
    %1 = tpu.iota {dimensions = array<i32: 1>} : vector<8x128xi32>
    %cst = arith.constant 0.000000e+00 : f32
    %2 = vector.broadcast %cst : f32 to vector<8x128xf32>
    %3 = vector.extract_strided_slice %0 {offsets = [0, 0], sizes = [8, 1], strides = [1, 1]} : vector<8x4xi32> to vector<8x1xi32>
    %4 = vector.broadcast %3 : vector<8x1xi32> to vector<8x128xi32>
    %5 = arith.cmpi eq, %1, %4 : vector<8x128xi32>
    %6 = arith.extui %5 : vector<8x128xi1> to vector<8x128xi32>
    %7 = arith.sitofp %6 : vector<8x128xi32> to vector<8x128xf32>
    %8 = arith.addf %2, %7 : vector<8x128xf32>
    %9 = vector.extract_strided_slice %0 {offsets = [0, 1], sizes = [8, 1], strides = [1, 1]} : vector<8x4xi32> to vector<8x1xi32>
    %10 = vector.broadcast %9 : vector<8x1xi32> to vector<8x128xi32>
    %11 = arith.cmpi eq, %1, %10 : vector<8x128xi32>
    %12 = arith.extui %11 : vector<8x128xi1> to vector<8x128xi32>
    %13 = arith.sitofp %12 : vector<8x128xi32> to vector<8x128xf32>
    %14 = arith.addf %8, %13 : vector<8x128xf32>
    %15 = vector.extract_strided_slice %0 {offsets = [0, 2], sizes = [8, 1], strides = [1, 1]} : vector<8x4xi32> to vector<8x1xi32>
    %16 = vector.broadcast %15 : vector<8x1xi32> to vector<8x128xi32>
    %17 = arith.cmpi eq, %1, %16 : vector<8x128xi32>
    %18 = arith.extui %17 : vector<8x128xi1> to vector<8x128xi32>
    %19 = arith.sitofp %18 : vector<8x128xi32> to vector<8x128xf32>
    %20 = arith.addf %14, %19 : vector<8x128xf32>
    %21 = vector.extract_strided_slice %0 {offsets = [0, 3], sizes = [8, 1], strides = [1, 1]} : vector<8x4xi32> to vector<8x1xi32>
    %22 = vector.broadcast %21 : vector<8x1xi32> to vector<8x128xi32>
    %23 = arith.cmpi eq, %1, %22 : vector<8x128xi32>
    %24 = arith.extui %23 : vector<8x128xi1> to vector<8x128xi32>
    %25 = arith.sitofp %24 : vector<8x128xi32> to vector<8x128xf32>
    %26 = arith.addf %20, %25 : vector<8x128xf32>
    %c0_1 = arith.constant 0 : index
    %c0_2 = arith.constant 0 : index
    %27 = vector.load %arg2[%c0_1, %c0_2] : memref<128x128xf32, #tpu.memory_space<vmem>>, vector<128x128xf32>
    %cst_3 = arith.constant dense<0.000000e+00> : vector<8x128xf32>
    %28 = tpu.matmul %26, %27, %cst_3 {dimension_numbers = #tpu.dot_dimension_numbers<[1], [0], [0], [1], [0, 0, 1, 1], [], []>, precision = #tpu.contract_precision<fp32>} : vector<8x128xf32>, vector<128x128xf32>, vector<8x128xf32> -> vector<8x128xf32>
    %c0_4 = arith.constant 0 : index
    %c0_5 = arith.constant 0 : index
    %29 = vector.load %arg3[%c0_4, %c0_5] : memref<8x128xf32, #tpu.memory_space<vmem>>, vector<8x128xf32>
    tpu.vector_store %arg3[%c0_4, %c0_5], %28 {strides = array<i32>} : memref<8x128xf32, #tpu.memory_space<vmem>>, vector<8x128xf32>,
    return
  }
  func.func @transform_0(%arg0: i32) -> (i32, i32) {
    %c0_i32 = arith.constant 0 : i32
    %c0_i32_0 = arith.constant 0 : i32
    return %arg0, %c0_i32 : i32, i32
  }
  func.func @transform_1(%arg0: i32) -> (i32, i32) {
    %c0_i32 = arith.constant 0 : i32
    %c0_i32_0 = arith.constant 0 : i32
    %c0_i32_1 = arith.constant 0 : i32
    return %c0_i32, %c0_i32_0 : i32, i32
  }
  func.func @transform_2(%arg0: i32) -> (i32, i32) {
    %c0_i32 = arith.constant 0 : i32
    %c0_i32_0 = arith.constant 0 : i32
    return %arg0, %c0_i32 : i32, i32
  }
}

</mosaic_0001>

<llo_original>
// kernel: tpu_custom_call.1
$region0: #{tpu_custom_call.1}
  #allocation0 [shape = 'u32[]', space=smem, size = 0x4, offset = 0x4, fixed_abs, tag = 'smem constant byte address 0x4 - core index']
  #allocation1 [shape = 'u32[72,128]{1,0:T(1,128)}', space=vmem, size = 0x9000, scoped, tag = 'internal scratch']
  %s0 = inlined_call_operand.vmem [shape: s32[8,4], index: 0, kind: input, shape index: {}]
  %s1 = inlined_call_operand.hbm [shape: f32[128,128], index: 1, kind: input, shape index: {}]
  %s2 = inlined_call_operand.hbm [shape: f32[8,128], index: 2, kind: output, shape index: {}]
  %s3 = sld [smem:[#allocation0]]
  $region22: #{tpu_custom_call.1} parent=0
    _
  %s5 = ssub.s32 1, %s3
  %s6 = scalar_select 0, %s5, %s3
  $region1: #{tpu_custom_call.1} parent=0
    #allocation2 [shape = 'u8[65536]{0}', space=vmem, size = 0x10000, scoped, tag = 'input window, operand 1, single buffered']
    #allocation3 [shape = 's32[1]{0}', space=sflag, size = 0x4, scoped, tag = 'scoped memory for tpu_custom_call.1']
    #allocation4 [shape = 's32[1]{0}', space=sflag, size = 0x4, scoped, tag = 'scoped memory for tpu_custom_call.1']
    #allocation5 [shape = 'u8[4096]{0}', space=vmem, size = 0x1000, scoped, tag = 'output window, operand 0, single buffered']
    %7 = vsyncpa [#allocation3], 0
    %8 = vsyncpa [#allocation4], 0
    // Predicated region
    $region2: #{tpu_custom_call.1} parent=1 // pred_check
      _
    $region3: #{tpu_custom_call.1} parent=1 // pred_check_branch
      %10 = sbr.rel (0) target = $region5
    $region4: #{tpu_custom_call.1} parent=1 // pred_region
      _
    $region5: #{tpu_custom_call.1} parent=1 // pred_fallthru
      _
    // Predicated region
    $region6: #{tpu_custom_call.1} parent=1 // pred_check
      _
    $region7: #{tpu_custom_call.1} parent=1 // pred_check_branch
      %12 = sbr.rel (0) target = $region9
    $region8: #{tpu_custom_call.1} parent=1 // pred_region
      %14 = vsyncadd [#allocation3], 0
      %s15 = sshll.u32 %s1, 4
      %s16 = int_to_ptr.hbm [resolvable:$true] %s15
      %s17 = sshll.u32 [#allocation2], 4
      %s18 = int_to_ptr.vmem [resolvable:$true] %s17
      %23 = dma.hbm_to_vmem [thread:$0]  %s16, 2048, %s18, [#allocation3], 128, 128, 8
    $region9: #{tpu_custom_call.1} parent=1 // pred_fallthru
      _
    // Predicated region
    $region10: #{tpu_custom_call.1} parent=1 // pred_check
      _
    $region11: #{tpu_custom_call.1} parent=1 // pred_check_branch
      %25 = sbr.rel (0) target = $region13
    $region12: #{tpu_custom_call.1} parent=1 // pred_region
      %27 = dma.done [#allocation3], 2048
    $region13: #{tpu_custom_call.1} parent=1 // pred_fallthru
      _
    %v28 = vld [vmem:[%s0] sm:$0xff]
    %v29 = vlaneseq
    %v30 = vand.u32 %v29, 127
    %31 = vset.pattern.permute.xlu0 0
    %32 = vperm.xlu0 %31, %v28
    %v33 = vpop.permute.xlu0 %32
    %vm34 = vcmp.eq.s32.totalorder %v30, %v33
    %v35 = vsel %vm34, 1, 0
    %v36 = vcvt.s32.f32 %v35
    %v37 = vadd.f32 %v36, 0.0
    %38 = vset.pattern.permute.xlu0 1
    %39 = vperm.xlu0 %38, %v28
    %v40 = vpop.permute.xlu0 %39
    %vm41 = vcmp.eq.s32.totalorder %v30, %v40
    %v42 = vsel %vm41, 1, 0
    %v43 = vcvt.s32.f32 %v42
    %v44 = vadd.f32 %v37, %v43
    %45 = vset.pattern.permute.xlu0 2
    %46 = vperm.xlu0 %45, %v28
    %v47 = vpop.permute.xlu0 %46
    %vm48 = vcmp.eq.s32.totalorder %v30, %v47
    %v49 = vsel %vm48, 1, 0
    %v50 = vcvt.s32.f32 %v49
    %v51 = vadd.f32 %v44, %v50
    %52 = vset.pattern.permute.xlu0 3
    %53 = vperm.xlu0 %52, %v28
    %v54 = vpop.permute.xlu0 %53
    %vm55 = vcmp.eq.s32.totalorder %v30, %v54
    %v56 = vsel %vm55, 1, 0
    %v57 = vcvt.s32.f32 %v56
    %v58 = vadd.f32 %v51, %v57
    %v59 = vld [vmem:[#allocation2] sm:$0xff]
    %v60 = vld [vmem:[#allocation2 + $0x8] sm:$0xff]
    %v61 = vld [vmem:[#allocation2 + $0x10] sm:$0xff]
    %v62 = vld [vmem:[#allocation2 + $0x18] sm:$0xff]
    %v63 = vld [vmem:[#allocation2 + $0x20] sm:$0xff]
    %v64 = vld [vmem:[#allocation2 + $0x28] sm:$0xff]
    %v65 = vld [vmem:[#allocation2 + $0x30] sm:$0xff]
    %v66 = vld [vmem:[#allocation2 + $0x38] sm:$0xff]
    %v67 = vld [vmem:[#allocation2 + $0x40] sm:$0xff]
    %v68 = vld [vmem:[#allocation2 + $0x48] sm:$0xff]
    %v69 = vld [vmem:[#allocation2 + $0x50] sm:$0xff]
    %v70 = vld [vmem:[#allocation2 + $0x58] sm:$0xff]
    %v71 = vld [vmem:[#allocation2 + $0x60] sm:$0xff]
    %v72 = vld [vmem:[#allocation2 + $0x68] sm:$0xff]
    %v73 = vld [vmem:[#allocation2 + $0x70] sm:$0xff]
    %v74 = vld [vmem:[#allocation2 + $0x78] sm:$0xff]
    %v75 = vand.u32 %v74, 4294901760
    %76 = vmatpush.msra.mxu0 %v75
    %v77 = vand.u32 %v73, 4294901760
    %78 = vmatpush.msra.mxu0 %v77
    %v79 = vand.u32 %v72, 4294901760
    %80 = vmatpush.msra.mxu0 %v79
    %v81 = vand.u32 %v71, 4294901760
    %82 = vmatpush.msra.mxu0 %v81
    %v83 = vand.u32 %v70, 4294901760
    %84 = vmatpush.msra.mxu0 %v83
    %v85 = vand.u32 %v69, 4294901760
    %86 = vmatpush.msra.mxu0 %v85
    %v87 = vand.u32 %v68, 4294901760
    %88 = vmatpush.msra.mxu0 %v87
    %v89 = vand.u32 %v67, 4294901760
    %90 = vmatpush.msra.mxu0 %v89
    %v91 = vand.u32 %v66, 4294901760
    %92 = vmatpush.msra.mxu0 %v91
    %v93 = vand.u32 %v65, 4294901760
    %94 = vmatpush.msra.mxu0 %v93
    %v95 = vand.u32 %v64, 4294901760
    %96 = vmatpush.msra.mxu0 %v95
    %v97 = vand.u32 %v63, 4294901760
    %98 = vmatpush.msra.mxu0 %v97
    %v99 = vand.u32 %v62, 4294901760
    %100 = vmatpush.msra.mxu0 %v99
    %v101 = vand.u32 %v61, 4294901760
    %102 = vmatpush.msra.mxu0 %v101
    %v103 = vand.u32 %v60, 4294901760
    %104 = vmatpush.msra.mxu0 %v103
    %v105 = vand.u32 %v59, 4294901760
    %106 = vmatpush.msra.mxu0 %v105
    %v107 = vand.u32 %v58, 4294901760
    %v108 = vsub.f32 %v58, %v107
    %v109 = vand.u32 %v108, 4294901760
    %v110 = vsub.f32 %v108, %v109
    %v111 = vand.u32 %v110, 4294901760
    %112 = vmatmul.f32.gmra.mxu0 %v111
    %v113 = vpop.f32.mrf.mxu0
    %v114 = vadd.f32 0.0, %v113
    %115 = vdwg.mxu0
    %v116 = vand.u32 %v74, 4294901760
    %v117 = vsub.f32 %v74, %v116
    %v118 = vand.u32 %v117, 4294901760
    %v119 = vsub.f32 %v117, %v118
    %v120 = vand.u32 %v119, 4294901760
    %121 = vmatpush.msra.mxu0 %v120
    %v122 = vand.u32 %v73, 4294901760
    %v123 = vsub.f32 %v73, %v122
    %v124 = vand.u32 %v123, 4294901760
    %v125 = vsub.f32 %v123, %v124
    %v126 = vand.u32 %v125, 4294901760
    %127 = vmatpush.msra.mxu0 %v126
    %v128 = vand.u32 %v72, 4294901760
    %v129 = vsub.f32 %v72, %v128
    %v130 = vand.u32 %v129, 4294901760
    %v131 = vsub.f32 %v129, %v130
    %v132 = vand.u32 %v131, 4294901760
    %133 = vmatpush.msra.mxu0 %v132
    %v134 = vand.u32 %v71, 4294901760
    %v135 = vsub.f32 %v71, %v134
    %v136 = vand.u32 %v135, 4294901760
    %v137 = vsub.f32 %v135, %v136
    %v138 = vand.u32 %v137, 4294901760
    %139 = vmatpush.msra.mxu0 %v138
    %v140 = vand.u32 %v70, 4294901760
    %v141 = vsub.f32 %v70, %v140
    %v142 = vand.u32 %v141, 4294901760
    %v143 = vsub.f32 %v141, %v142
    %v144 = vand.u32 %v143, 4294901760
    %145 = vmatpush.msra.mxu0 %v144
    %v146 = vand.u32 %v69, 4294901760
    %v147 = vsub.f32 %v69, %v146
    %v148 = vand.u32 %v147, 4294901760
    %v149 = vsub.f32 %v147, %v148
    %v150 = vand.u32 %v149, 4294901760
    %151 = vmatpush.msra.mxu0 %v150
    %v152 = vand.u32 %v68, 4294901760
    %v153 = vsub.f32 %v68, %v152
    %v154 = vand.u32 %v153, 4294901760
    %v155 = vsub.f32 %v153, %v154
    %v156 = vand.u32 %v155, 4294901760
    %157 = vmatpush.msra.mxu0 %v156
    %v158 = vand.u32 %v67, 4294901760
    %v159 = vsub.f32 %v67, %v158
    %v160 = vand.u32 %v159, 4294901760
    %v161 = vsub.f32 %v159, %v160
    %v162 = vand.u32 %v161, 4294901760
    %163 = vmatpush.msra.mxu0 %v162
    %v164 = vand.u32 %v66, 4294901760
    %v165 = vsub.f32 %v66, %v164
    %v166 = vand.u32 %v165, 4294901760
    %v167 = vsub.f32 %v165, %v166
    %v168 = vand.u32 %v167, 4294901760
    %169 = vmatpush.msra.mxu0 %v168
    %v170 = vand.u32 %v65, 4294901760
    %v171 = vsub.f32 %v65, %v170
    %v172 = vand.u32 %v171, 4294901760
    %v173 = vsub.f32 %v171, %v172
    %v174 = vand.u32 %v173, 4294901760
    %175 = vmatpush.msra.mxu0 %v174
    %v176 = vand.u32 %v64, 4294901760
    %v177 = vsub.f32 %v64, %v176
    %v178 = vand.u32 %v177, 4294901760
    %v179 = vsub.f32 %v177, %v178
    %v180 = vand.u32 %v179, 4294901760
    %181 = vmatpush.msra.mxu0 %v180
    %v182 = vand.u32 %v63, 4294901760
    %v183 = vsub.f32 %v63, %v182
    %v184 = vand.u32 %v183, 4294901760
    %v185 = vsub.f32 %v183, %v184
    %v186 = vand.u32 %v185, 4294901760
    %187 = vmatpush.msra.mxu0 %v186
    %v188 = vand.u32 %v62, 4294901760
    %v189 = vsub.f32 %v62, %v188
    %v190 = vand.u32 %v189, 4294901760
    %v191 = vsub.f32 %v189, %v190
    %v192 = vand.u32 %v191, 4294901760
    %193 = vmatpush.msra.mxu0 %v192
    %v194 = vand.u32 %v61, 4294901760
    %v195 = vsub.f32 %v61, %v194
    %v196 = vand.u32 %v195, 4294901760
    %v197 = vsub.f32 %v195, %v196
    %v198 = vand.u32 %v197, 4294901760
    %199 = vmatpush.msra.mxu0 %v198
    %v200 = vand.u32 %v60, 4294901760
    %v201 = vsub.f32 %v60, %v200
    %v202 = vand.u32 %v201, 4294901760
    %v203 = vsub.f32 %v201, %v202
    %v204 = vand.u32 %v203, 4294901760
    %205 = vmatpush.msra.mxu0 %v204
    %v206 = vand.u32 %v59, 4294901760
    %v207 = vsub.f32 %v59, %v206
    %v208 = vand.u32 %v207, 4294901760
    %v209 = vsub.f32 %v207, %v208
    %v210 = vand.u32 %v209, 4294901760
    %211 = vmatpush.msra.mxu0 %v210
    %v212 = vand.u32 %v58, 4294901760
    %213 = vmatmul.f32.gmra.mxu0 %v212
    %v214 = vpop.f32.mrf.mxu0
    %v215 = vadd.f32 %v114, %v214
    %216 = vdwg.mxu0
    %v217 = vand.u32 %v74, 4294901760
    %v218 = vsub.f32 %v74, %v217
    %219 = vmatpush.msra.mxu0 %v218
    %v220 = vand.u32 %v73, 4294901760
    %v221 = vsub.f32 %v73, %v220
    %222 = vmatpush.msra.mxu0 %v221
    %v223 = vand.u32 %v72, 4294901760
    %v224 = vsub.f32 %v72, %v223
    %225 = vmatpush.msra.mxu0 %v224
    %v226 = vand.u32 %v71, 4294901760
    %v227 = vsub.f32 %v71, %v226
    %228 = vmatpush.msra.mxu0 %v227
    %v229 = vand.u32 %v70, 4294901760
    %v230 = vsub.f32 %v70, %v229
    %231 = vmatpush.msra.mxu0 %v230
    %v232 = vand.u32 %v69, 4294901760
    %v233 = vsub.f32 %v69, %v232
    %234 = vmatpush.msra.mxu0 %v233
    %v235 = vand.u32 %v68, 4294901760
    %v236 = vsub.f32 %v68, %v235
    %237 = vmatpush.msra.mxu0 %v236
    %v238 = vand.u32 %v67, 4294901760
    %v239 = vsub.f32 %v67, %v238
    %240 = vmatpush.msra.mxu0 %v239
    %v241 = vand.u32 %v66, 4294901760
    %v242 = vsub.f32 %v66, %v241
    %243 = vmatpush.msra.mxu0 %v242
    %v244 = vand.u32 %v65, 4294901760
    %v245 = vsub.f32 %v65, %v244
    %246 = vmatpush.msra.mxu0 %v245
    %v247 = vand.u32 %v64, 4294901760
    %v248 = vsub.f32 %v64, %v247
    %249 = vmatpush.msra.mxu0 %v248
    %v250 = vand.u32 %v63, 4294901760
    %v251 = vsub.f32 %v63, %v250
    %252 = vmatpush.msra.mxu0 %v251
    %v253 = vand.u32 %v62, 4294901760
    %v254 = vsub.f32 %v62, %v253
    %255 = vmatpush.msra.mxu0 %v254
    %v256 = vand.u32 %v61, 4294901760
    %v257 = vsub.f32 %v61, %v256
    %258 = vmatpush.msra.mxu0 %v257
    %v259 = vand.u32 %v60, 4294901760
    %v260 = vsub.f32 %v60, %v259
    %261 = vmatpush.msra.mxu0 %v260
    %v262 = vand.u32 %v59, 4294901760
    %v263 = vsub.f32 %v59, %v262
    %264 = vmatpush.msra.mxu0 %v263
    %v265 = vand.u32 %v58, 4294901760
    %v266 = vsub.f32 %v58, %v265
    %267 = vmatmul.f32.gmra.mxu0 %v266
    %v268 = vpop.f32.mrf.mxu0
    %v269 = vadd.f32 %v215, %v268
    %270 = vdwg.mxu0
    %v271 = vand.u32 %v74, 4294901760
    %272 = vmatpush.msra.mxu0 %v271
    %v273 = vand.u32 %v73, 4294901760
    %274 = vmatpush.msra.mxu0 %v273
    %v275 = vand.u32 %v72, 4294901760
    %276 = vmatpush.msra.mxu0 %v275
    %v277 = vand.u32 %v71, 4294901760
    %278 = vmatpush.msra.mxu0 %v277
    %v279 = vand.u32 %v70, 4294901760
    %280 = vmatpush.msra.mxu0 %v279
    %v281 = vand.u32 %v69, 4294901760
    %282 = vmatpush.msra.mxu0 %v281
    %v283 = vand.u32 %v68, 4294901760
    %284 = vmatpush.msra.mxu0 %v283
    %v285 = vand.u32 %v67, 4294901760
    %286 = vmatpush.msra.mxu0 %v285
    %v287 = vand.u32 %v66, 4294901760
    %288 = vmatpush.msra.mxu0 %v287
    %v289 = vand.u32 %v65, 4294901760
    %290 = vmatpush.msra.mxu0 %v289
    %v291 = vand.u32 %v64, 4294901760
    %292 = vmatpush.msra.mxu0 %v291
    %v293 = vand.u32 %v63, 4294901760
    %294 = vmatpush.msra.mxu0 %v293
    %v295 = vand.u32 %v62, 4294901760
    %296 = vmatpush.msra.mxu0 %v295
    %v297 = vand.u32 %v61, 4294901760
    %298 = vmatpush.msra.mxu0 %v297
    %v299 = vand.u32 %v60, 4294901760
    %300 = vmatpush.msra.mxu0 %v299
    %v301 = vand.u32 %v59, 4294901760
    %302 = vmatpush.msra.mxu0 %v301
    %v303 = vand.u32 %v58, 4294901760
    %v304 = vsub.f32 %v58, %v303
    %v305 = vand.u32 %v304, 4294901760
    %306 = vmatmul.f32.gmra.mxu0 %v305
    %v307 = vpop.f32.mrf.mxu0
    %v308 = vadd.f32 %v269, %v307
    %309 = vdwg.mxu0
    %v310 = vand.u32 %v74, 4294901760
    %v311 = vsub.f32 %v74, %v310
    %v312 = vand.u32 %v311, 4294901760
    %313 = vmatpush.msra.mxu0 %v312
    %v314 = vand.u32 %v73, 4294901760
    %v315 = vsub.f32 %v73, %v314
    %v316 = vand.u32 %v315, 4294901760
    %317 = vmatpush.msra.mxu0 %v316
    %v318 = vand.u32 %v72, 4294901760
    %v319 = vsub.f32 %v72, %v318
    %v320 = vand.u32 %v319, 4294901760
    %321 = vmatpush.msra.mxu0 %v320
    %v322 = vand.u32 %v71, 4294901760
    %v323 = vsub.f32 %v71, %v322
    %v324 = vand.u32 %v323, 4294901760
    %325 = vmatpush.msra.mxu0 %v324
    %v326 = vand.u32 %v70, 4294901760
    %v327 = vsub.f32 %v70, %v326
    %v328 = vand.u32 %v327, 4294901760
    %329 = vmatpush.msra.mxu0 %v328
    %v330 = vand.u32 %v69, 4294901760
    %v331 = vsub.f32 %v69, %v330
    %v332 = vand.u32 %v331, 4294901760
    %333 = vmatpush.msra.mxu0 %v332
    %v334 = vand.u32 %v68, 4294901760
    %v335 = vsub.f32 %v68, %v334
    %v336 = vand.u32 %v335, 4294901760
    %337 = vmatpush.msra.mxu0 %v336
    %v338 = vand.u32 %v67, 4294901760
    %v339 = vsub.f32 %v67, %v338
    %v340 = vand.u32 %v339, 4294901760
    %341 = vmatpush.msra.mxu0 %v340
    %v342 = vand.u32 %v66, 4294901760
    %v343 = vsub.f32 %v66, %v342
    %v344 = vand.u32 %v343, 4294901760
    %345 = vmatpush.msra.mxu0 %v344
    %v346 = vand.u32 %v65, 4294901760
    %v347 = vsub.f32 %v65, %v346
    %v348 = vand.u32 %v347, 4294901760
    %349 = vmatpush.msra.mxu0 %v348
    %v350 = vand.u32 %v64, 4294901760
    %v351 = vsub.f32 %v64, %v350
    %v352 = vand.u32 %v351, 4294901760
    %353 = vmatpush.msra.mxu0 %v352
    %v354 = vand.u32 %v63, 4294901760
    %v355 = vsub.f32 %v63, %v354
    %v356 = vand.u32 %v355, 4294901760
    %357 = vmatpush.msra.mxu0 %v356
    %v358 = vand.u32 %v62, 4294901760
    %v359 = vsub.f32 %v62, %v358
    %v360 = vand.u32 %v359, 4294901760
    %361 = vmatpush.msra.mxu0 %v360
    %v362 = vand.u32 %v61, 4294901760
    %v363 = vsub.f32 %v61, %v362
    %v364 = vand.u32 %v363, 4294901760
    %365 = vmatpush.msra.mxu0 %v364
    %v366 = vand.u32 %v60, 4294901760
    %v367 = vsub.f32 %v60, %v366
    %v368 = vand.u32 %v367, 4294901760
    %369 = vmatpush.msra.mxu0 %v368
    %v370 = vand.u32 %v59, 4294901760
    %v371 = vsub.f32 %v59, %v370
    %v372 = vand.u32 %v371, 4294901760
    %373 = vmatpush.msra.mxu0 %v372
    %v374 = vand.u32 %v58, 4294901760
    %375 = vmatmul.f32.gmra.mxu0 %v374
    %v376 = vpop.f32.mrf.mxu0
    %v377 = vadd.f32 %v308, %v376
    %378 = vdwg.mxu0
    %v379 = vand.u32 %v74, 4294901760
    %380 = vmatpush.msra.mxu0 %v379
    %v381 = vand.u32 %v73, 4294901760
    %382 = vmatpush.msra.mxu0 %v381
    %v383 = vand.u32 %v72, 4294901760
    %384 = vmatpush.msra.mxu0 %v383
    %v385 = vand.u32 %v71, 4294901760
    %386 = vmatpush.msra.mxu0 %v385
    %v387 = vand.u32 %v70, 4294901760
    %388 = vmatpush.msra.mxu0 %v387
    %v389 = vand.u32 %v69, 4294901760
    %390 = vmatpush.msra.mxu0 %v389
    %v391 = vand.u32 %v68, 4294901760
    %392 = vmatpush.msra.mxu0 %v391
    %v393 = vand.u32 %v67, 4294901760
    %394 = vmatpush.msra.mxu0 %v393
    %v395 = vand.u32 %v66, 4294901760
    %396 = vmatpush.msra.mxu0 %v395
    %v397 = vand.u32 %v65, 4294901760
    %398 = vmatpush.msra.mxu0 %v397
    %v399 = vand.u32 %v64, 4294901760
    %400 = vmatpush.msra.mxu0 %v399
    %v401 = vand.u32 %v63, 4294901760
    %402 = vmatpush.msra.mxu0 %v401
    %v403 = vand.u32 %v62, 4294901760
    %404 = vmatpush.msra.mxu0 %v403
    %v405 = vand.u32 %v61, 4294901760
    %406 = vmatpush.msra.mxu0 %v405
    %v407 = vand.u32 %v60, 4294901760
    %408 = vmatpush.msra.mxu0 %v407
    %v409 = vand.u32 %v59, 4294901760
    %410 = vmatpush.msra.mxu0 %v409
    %v411 = vand.u32 %v58, 4294901760
    %412 = vmatmul.f32.gmra.mxu0 %v411
    %v413 = vpop.f32.mrf.mxu0
    %v414 = vadd.f32 %v377, %v413
    %415 = vdwg.mxu0
    %416 = vst [vmem:[#allocation5] sm:$0xff] %v414
    // Predicated region
    $region14: #{tpu_custom_call.1} parent=1 // pred_check
      _
    $region15: #{tpu_custom_call.1} parent=1 // pred_check_branch
      %418 = sbr.rel (0) target = $region17
    $region16: #{tpu_custom_call.1} parent=1 // pred_region
      %420 = vsyncadd [#allocation4], 0
      %s422 = sshll.u32 [#allocation5], 4
      %s423 = int_to_ptr.vmem [resolvable:$true] %s422
      %s424 = sshll.u32 %s2, 4
      %s425 = int_to_ptr.hbm [resolvable:$true] %s424
      %427 = dma.vmem_to_hbm [thread:$0]  %s423, 128, %s425, [#allocation4]
    $region17: #{tpu_custom_call.1} parent=1 // pred_fallthru
      _
    // Predicated region
    $region18: #{tpu_custom_call.1} parent=1 // pred_check
      _
    $region19: #{tpu_custom_call.1} parent=1 // pred_check_branch
      %429 = sbr.rel (0) target = $region21
    $region20: #{tpu_custom_call.1} parent=1 // pred_region
      %431 = dma.done [#allocation4], 128
    $region21: #{tpu_custom_call.1} parent=1 // pred_fallthru
      _
    %432 = vsyncpa [#allocation3], 1
    %433 = vsyncpa [#allocation4], 1

</llo_original>
